<compile_context>
chip_gen: v7x
topology: tpu7x:2x2x1
jax: 0.10.0
libtpu: 0.0.40
codegen_flags: <defaults>
</compile_context>

<pallas_src>
import jax
import jax.numpy as jnp
from jax.experimental import pallas as pl
from jax.experimental.pallas import tpu as pltpu

N, C, H, W = 2, 4, 16, 16
C0, C1 = 1, 3            # channel slice [1:3]  (baked-in representative fn)
HSTRIDE = 2              # row stride (::2 on H)
OC = C1 - C0
OH = H // HSTRIDE


def getitem_kernel(x_ref, o_ref):
    # x_ref block: (N, OH, HSTRIDE, W) slab for one kept channel (the channel
    # __getitem__ already happened in the BlockSpec DMA).  Select stride
    # phase 0 with a static slice of the loaded *value* -- no strided or
    # mixed Ref indexers -- and store the whole (N, OH, W) output block.
    o_ref[...] = x_ref[...][:, :, 0, :]


def lambda_getitem(x):
    n, c, h, w = x.shape
    # Guards for the baked-in lambda (see correctness notes in the review).
    assert h % HSTRIDE == 0, "reference ::2 on odd H needs padding; not supported"
    assert C1 <= c, "channel slice [1:3] requires C >= 3"
    oh = h // HSTRIDE

    # Free row-major view: (N, C, H, W) -> (N, C, OH, HSTRIDE, W).
    x5 = x.reshape(n, c, oh, HSTRIDE, w)

    itemsize = jnp.dtype(x.dtype).itemsize
    # Both stride phases of the kept channels are read; kept elements are written.
    bytes_in = n * OC * oh * HSTRIDE * w * itemsize
    bytes_out = n * OC * oh * w * itemsize

    return pl.pallas_call(
        getitem_kernel,
        out_shape=jax.ShapeDtypeStruct((n, OC, oh, w), x.dtype),
        grid=(OC,),
        in_specs=[
            pl.BlockSpec(
                (n, None, oh, HSTRIDE, w),           # full batch per step, C squeezed
                lambda ch: (0, C0 + ch, 0, 0, 0),    # DMA does the channel slice
            )
        ],
        out_specs=pl.BlockSpec(
            (n, None, oh, w),                        # full batch per step, OC squeezed
            lambda ch: (0, ch, 0, 0),
        ),
        compiler_params=pltpu.CompilerParams(
            # 2 parallel steps -> one per TensorCore on v7x; harmless on v5e/v6e.
            dimension_semantics=("parallel",),
            # Explicit scoped-VMEM budget; <= 64 MiB so it is legal on every
            # generation (v7x physical VMEM is 64 MiB per TC).
            vmem_limit_bytes=32 * 1024 * 1024,
        ),
        cost_estimate=pl.CostEstimate(
            flops=0, transcendentals=0, bytes_accessed=bytes_in + bytes_out),
    )(x5)


if __name__ == "__main__":
    key = jax.random.PRNGKey(0)
    x = jax.random.normal(key, (N, C, H, W), dtype=jnp.float32)

    out = lambda_getitem(x)
    out = jax.block_until_ready(out)

    # Reference (what the PyTorch LambdaModule with this fn would return).
    ref = x[:, C0:C1, ::HSTRIDE, :]
    assert out.shape == ref.shape, (out.shape, ref.shape)
    assert out.dtype == ref.dtype
    assert jnp.allclose(out, ref), "mismatch vs reference slicing"

    print("KERNEL_OK")
</pallas_src>

<mosaic_0001>
module attributes {stable_mosaic.version = 11 : i64} {
  func.func @getitem_kernel(%arg0: i32, %arg1: memref<2x1x8x2x16xf32, #tpu.memory_space<vmem>>, %arg2: memref<2x1x8x16xf32, #tpu.memory_space<vmem>>) attributes {dimension_semantics = [#tpu.dimension_semantics<parallel>], iteration_bounds = array<i64: 2>, scalar_prefetch = 0 : i64, scratch_operands = 0 : i64, tpu.core_type = #tpu.core_type<tc>, window_params = [{transform_indices = @transform_0, window_bounds = array<i64: 2, 1, 8, 2, 16>}, {transform_indices = @transform_1, window_bounds = array<i64: 2, 1, 8, 16>}]} {
    %c0 = arith.constant 0 : index
    %c0_0 = arith.constant 0 : index
    %c0_1 = arith.constant 0 : index
    %c0_2 = arith.constant 0 : index
    %c0_3 = arith.constant 0 : index
    %0 = vector.load %arg1[%c0, %c0_0, %c0_1, %c0_2, %c0_3] : memref<2x1x8x2x16xf32, #tpu.memory_space<vmem>>, vector<2x1x8x2x16xf32>
    %1 = vector.shape_cast %0 : vector<2x1x8x2x16xf32> to vector<2x8x2x16xf32>
    %2 = vector.extract_strided_slice %1 {offsets = [0, 0, 0, 0], sizes = [2, 8, 1, 16], strides = [1, 1, 1, 1]} : vector<2x8x2x16xf32> to vector<2x8x1x16xf32>
    %3 = vector.shape_cast %2 : vector<2x8x1x16xf32> to vector<2x8x16xf32>
    %c0_4 = arith.constant 0 : index
    %c0_5 = arith.constant 0 : index
    %c0_6 = arith.constant 0 : index
    %c0_7 = arith.constant 0 : index
    %4 = vector.load %arg2[%c0_4, %c0_5, %c0_6, %c0_7] : memref<2x1x8x16xf32, #tpu.memory_space<vmem>>, vector<2x1x8x16xf32>
    %5 = vector.shape_cast %4 : vector<2x1x8x16xf32> to vector<2x8x16xf32>
    %6 = vector.shape_cast %3 : vector<2x8x16xf32> to vector<2x1x8x16xf32>
    tpu.vector_store %arg2[%c0_4, %c0_5, %c0_6, %c0_7], %6 {strides = array<i32>} : memref<2x1x8x16xf32, #tpu.memory_space<vmem>>, vector<2x1x8x16xf32>,
    return
  }
  func.func @transform_0(%arg0: i32) -> (i32, i32, i32, i32, i32) {
    %c1_i32 = arith.constant 1 : i32
    %0 = arith.addi %c1_i32, %arg0 : i32
    %c0_i32 = arith.constant 0 : i32
    %c0_i32_0 = arith.constant 0 : i32
    %c0_i32_1 = arith.constant 0 : i32
    %c0_i32_2 = arith.constant 0 : i32
    %c0_i32_3 = arith.constant 0 : i32
    return %c0_i32, %0, %c0_i32_0, %c0_i32_1, %c0_i32_2 : i32, i32, i32, i32, i32
  }
  func.func @transform_1(%arg0: i32) -> (i32, i32, i32, i32) {
    %c0_i32 = arith.constant 0 : i32
    %c0_i32_0 = arith.constant 0 : i32
    %c0_i32_1 = arith.constant 0 : i32
    %c0_i32_2 = arith.constant 0 : i32
    return %c0_i32, %arg0, %c0_i32_0, %c0_i32_1 : i32, i32, i32, i32
  }
}

</mosaic_0001>

<llo_original>
// kernel: tpu_custom_call.1
$region0: #{tpu_custom_call.1}
  #allocation0 [shape = 'u32[]', space=smem, size = 0x4, offset = 0x4, fixed_abs, tag = 'smem constant byte address 0x4 - core index']
  #allocation1 [shape = 'u32[144,128]{1,0:T(1,128)}', space=vmem, size = 0x12000, scoped, tag = 'internal scratch']
  #allocation6 [shape = 's32[]', space=sflag, size = 0x4, offset = 0, fixed_abs, tag = 'sflag constant byte address 0x0 - dummy sync flag']
  %s0 = inlined_call_operand.hbm [shape: f32[2,4,8,2,16], index: 0, kind: input, shape index: {}]
  %s1 = inlined_call_operand.hbm [shape: f32[2,2,8,16], index: 1, kind: output, shape index: {}]
  %s2 = sld [smem:[#allocation0]]
  $region41: #{tpu_custom_call.1} parent=0
    _
  %s4 = ssub.s32 1, %s2
  %s5 = scalar_select 0, %s4, %s2
  $region1: #{tpu_custom_call.1} parent=0
    #allocation2 [shape = 'u8[32768]{0}', space=vmem, size = 0x8000, scoped, tag = 'input window, operand 0']
    #allocation3 [shape = 's32[2]{0}', space=sflag, size = 0x8, scoped, tag = 'scoped memory for tpu_custom_call.1']
    #allocation4 [shape = 's32[2]{0}', space=sflag, size = 0x8, scoped, tag = 'scoped memory for tpu_custom_call.1']
    #allocation5 [shape = 'u8[16384]{0}', space=vmem, size = 0x4000, scoped, tag = 'output window, operand 0']
    %6 = vsyncpa [#allocation3], 0
    %s7 = scalar_lea.sflag [#allocation3], 1
    %8 = vsyncpa %s7, 0
    %9 = vsyncpa [#allocation4], 0
    %s10 = scalar_lea.sflag [#allocation4], 1
    %11 = vsyncpa %s10, 0
    loop: start=0, step=1, limit=4
    $region2: #{tpu_custom_call.1} parent=1 // loop_pre_header
      _
    $region3: #{tpu_custom_call.1} parent=1 // loop_header
      %s13 = sphi 0, %s17
      %p14 = scmp.ge.s32.totalorder %s13, 4
      %s25 = sphi 0, %s27
      %s28 = sphi 0, %s25
      %s29 = sphi 0, %s28
      %s45 = sphi 0, %s29
      %s51 = sphi 0, %s53
      %s54 = sphi 0, %s51
      %s55 = sphi 0, %s54
      %s71 = sphi 0, %s55
    $region4: #{tpu_custom_call.1} parent=1 // loop_header_branch
      %16 = sbr.rel (%p14) target = $region8
    $region5: #{tpu_custom_call.1} parent=1 // loop_body
      %s18 = ssub.s32 %s13, 1
      %s19 = ssub.s32 %s13, 2
      %s20 = sadd.s32 %s13, 1
      %s21 = sadd.s32 %s13, 1
      %s22 = sadd.s32 %s20, 1
      %s23 = ssub.s32 %s21, %s22
      %p24 = scmp.eq.s32.totalorder %s23, 0
      %s26 = sadd.s32 %s25, 1
      %s27 = scalar_select %p24, %s25, %s26
      %p30 = pneg %p24
      %p31 = scmp.eq.s32.totalorder %s13, 1
      %p32 = por %p30, %p31
      %p33 = scmp.ne.s32.totalorder %s25, %s28
      %p34 = scmp.eq.s32.totalorder %s13, 0
      %p35 = por %p33, %p34
      %p36 = scmp.ne.s32.totalorder %s25, %s28
      %p37 = scmp.eq.s32.totalorder %s18, 1
      %p38 = por %p36, %p37
      %p39 = scmp.ne.s32.totalorder %s28, %s29
      %p40 = scmp.eq.s32.totalorder %s18, 0
      %p41 = por %p39, %p40
      %p42 = scmp.ne.s32.totalorder %s28, %s29
      %p43 = scmp.eq.s32.totalorder %s19, 1
      %p44 = por %p42, %p43
      %p46 = scmp.ne.s32.totalorder %s29, %s45
      %p47 = scmp.eq.s32.totalorder %s19, 0
      %p48 = por %p46, %p47
      %s49 = ssub.s32 %s13, %s20
      %p50 = scmp.eq.s32.totalorder %s49, 0
      %s52 = sadd.s32 %s51, 1
      %s53 = scalar_select %p50, %s51, %s52
      %p56 = pneg %p50
      %p57 = scmp.eq.s32.totalorder %s13, 1
      %p58 = por %p56, %p57
      %p59 = scmp.ne.s32.totalorder %s51, %s54
      %p60 = scmp.eq.s32.totalorder %s13, 0
      %p61 = por %p59, %p60
      %p62 = scmp.ne.s32.totalorder %s51, %s54
      %p63 = scmp.eq.s32.totalorder %s18, 1
      %p64 = por %p62, %p63
      %p65 = scmp.ne.s32.totalorder %s54, %s55
      %p66 = scmp.eq.s32.totalorder %s18, 0
      %p67 = por %p65, %p66
      %p68 = scmp.ne.s32.totalorder %s54, %s55
      %p69 = scmp.eq.s32.totalorder %s19, 1
      %p70 = por %p68, %p69
      %p72 = scmp.ne.s32.totalorder %s55, %s71
      %p73 = scmp.eq.s32.totalorder %s19, 0
      %p74 = por %p72, %p73
      %p75 = scmp.le.s32.totalorder 1, %s13
      %p76 = scmp.lt.s32.totalorder %s13, 3
      %p77 = pnand %p75, %p76
      %p78 = pneg %p77
      // Predicated region
      $region9: #{tpu_custom_call.1} parent=5 // pred_check
        _
      $region10: #{tpu_custom_call.1} parent=5 // pred_check_branch
        %80 = sbr.rel (%p77) target = $region12
      $region11: #{tpu_custom_call.1} parent=5 // pred_region
        %s81 = ssub.s32 %s13, 1
      $region12: #{tpu_custom_call.1} parent=5 // pred_fallthru
        _
      %p82 = scmp.lt.s32.totalorder %s13, 2
      // Predicated region
      $region13: #{tpu_custom_call.1} parent=5 // pred_check
        %p83 = pneg %p82
      $region14: #{tpu_custom_call.1} parent=5 // pred_check_branch
        %85 = sbr.rel (%p83) target = $region16
      $region15: #{tpu_custom_call.1} parent=5 // pred_region
        // Predicated region
        $region17: #{tpu_custom_call.1} parent=15 // pred_check
          %p86 = pneg %p35
        $region18: #{tpu_custom_call.1} parent=15 // pred_check_branch
          %88 = sbr.rel (%p86) target = $region20
        $region19: #{tpu_custom_call.1} parent=15 // pred_region
          #allocation7 [shape = 'u32[6]{0}', space=smem, size = 0x18, scoped, tag = 'DMA stride descriptor']
          %s89 = sand.u32 %s25, 1
          %s90 = scalar_lea.sflag [#allocation3], %s89
          %s91 = sand.u32 %s25, 1
          %s92 = smul.addr %s91, 32
          %s93 = scalar_lea.vmem [#allocation2], %s92
          %s94 = sadd.s32 %s13, 1
          %s96 = ssub.s32 512, 512
          %97 = vsyncadd %s90, %s96
          %s98 = smul.addr %s94, 8
          %s99 = smul.addr %s98, 32
          %s100 = scalar_lea.hbm %s0, %s99
          %s102 = sshll.u32 1, 14
          %s103 = sxor.u32 4294967295, %s102
          %s105 = sld [smem:[#allocation0]]
          %s106 = sadd.s32 2, %s105
          %s108 = sshll.u32 7, 26
          %s109 = sxor.u32 4294967295, %s108
          %s110 = sand.u32 0, %s109
          %s111 = sshll.u32 %s106, 26
          %s112 = sor.u32 %s110, %s111
          %s113 = sshll.u32 %s93, 4
          %s114 = int_to_ptr.vmem [resolvable:$true] %s113
          %120 = sst [smem:[#allocation7]] 1024
          %s121 = scalar_lea.smem [#allocation7], 1
          %122 = sst [smem:[%s121]] 256
          %s123 = scalar_lea.smem [#allocation7], 2
          %124 = sst [smem:[%s123]] 8
          %s125 = scalar_lea.smem [#allocation7], 3
          %126 = sst [smem:[%s125]] 32
          %s127 = scalar_lea.smem [#allocation7], 4
          %128 = sst [smem:[%s127]] 32
          %s129 = scalar_lea.smem [#allocation7], 5
          %130 = sst [smem:[%s129]] 2
          %132 = dma.general %s100, 512, %s114, %s90, [#allocation6], [#allocation7], %s112, 0
        $region20: #{tpu_custom_call.1} parent=15 // pred_fallthru
          _
      $region16: #{tpu_custom_call.1} parent=5 // pred_fallthru
        _
      %p133 = scmp.le.s32.totalorder 1, %s13
      %p134 = scmp.lt.s32.totalorder %s13, 3
      %p135 = pnand %p133, %p134
      %p136 = pneg %p135
      // Predicated region
      $region21: #{tpu_custom_call.1} parent=5 // pred_check
        _
      $region22: #{tpu_custom_call.1} parent=5 // pred_check_branch
        %138 = sbr.rel (%p135) target = $region24
      $region23: #{tpu_custom_call.1} parent=5 // pred_region
        %s139 = ssub.s32 %s13, 1
        %s140 = sand.u32 %s28, 1
        %s141 = scalar_lea.sflag [#allocation3], %s140
        %s142 = sand.u32 %s28, 1
        %s143 = smul.addr %s142, 32
        %s144 = scalar_lea.vmem [#allocation2], %s143
        // Predicated region
        $region25: #{tpu_custom_call.1} parent=23 // pred_check
          %p145 = pneg %p41
        $region26: #{tpu_custom_call.1} parent=23 // pred_check_branch
          %147 = sbr.rel (%p145) target = $region28
        $region27: #{tpu_custom_call.1} parent=23 // pred_region
          %148 = dma.done %s141, 512
        $region28: #{tpu_custom_call.1} parent=23 // pred_fallthru
          _
        %s149 = sand.u32 %s28, 1
        %s150 = scalar_lea.sflag [#allocation3], %s149
        %s151 = sand.u32 %s28, 1
        %s152 = smul.addr %s151, 32
        %s153 = scalar_lea.vmem [#allocation2], %s152
        %p154 = pneg %p41
        %p155 = pneg %p38
        %p156 = pneg %p67
        %p157 = pneg %p64
        %s158 = sand.u32 %s54, 1
        %s159 = scalar_lea.sflag [#allocation4], %s158
        %s160 = sand.u32 %s54, 1
        %s161 = smul.addr %s160, 16
        %s162 = scalar_lea.vmem [#allocation5], %s161
        %s163 = sadd.s32 %s18, 1
        %v164 = vld [vmem:[%s144] sm:$0x3]
        %v165 = vld [vmem:[%s144 + $0x2] sm:$0x3]
        %v166 = vld [vmem:[%s144 + $0x4] sm:$0x3]
        %v167 = vld [vmem:[%s144 + $0x6] sm:$0x3]
        %v168 = vld [vmem:[%s144 + $0x8] sm:$0x3]
        %v169 = vld [vmem:[%s144 + $0xa] sm:$0x3]
        %v170 = vld [vmem:[%s144 + $0xc] sm:$0x3]
        %v171 = vld [vmem:[%s144 + $0xe] sm:$0x3]
        %v172 = vld [vmem:[%s144 + $0x10] sm:$0x3]
        %v173 = vld [vmem:[%s144 + $0x12] sm:$0x3]
        %v174 = vld [vmem:[%s144 + $0x14] sm:$0x3]
        %v175 = vld [vmem:[%s144 + $0x16] sm:$0x3]
        %v176 = vld [vmem:[%s144 + $0x18] sm:$0x3]
        %v177 = vld [vmem:[%s144 + $0x1a] sm:$0x3]
        %v178 = vld [vmem:[%s144 + $0x1c] sm:$0x3]
        %v179 = vld [vmem:[%s144 + $0x1e] sm:$0x3]
        %v196 = vrot.slane %v165, 7
        %vm197 = vcmask 1041409
        %v198 = vsel %vm197, %v196, %v164
        %v199 = vrot.slane %v166, 6
        %vm200 = vcmask 1042434
        %v201 = vsel %vm200, %v199, %v198
        %v202 = vrot.slane %v167, 5
        %vm203 = vcmask 1043459
        %v204 = vsel %vm203, %v202, %v201
        %v205 = vrot.slane %v168, 4
        %vm206 = vcmask 1044484
        %v207 = vsel %vm206, %v205, %v204
        %v208 = vrot.slane %v169, 3
        %vm209 = vcmask 1045509
        %v210 = vsel %vm209, %v208, %v207
        %v211 = vrot.slane %v170, 2
        %vm212 = vcmask 1046534
        %v213 = vsel %vm212, %v211, %v210
        %v214 = vrot.slane %v171, 1
        %vm215 = vcmask 1047559
        %v216 = vsel %vm215, %v214, %v213
        %v217 = vrot.slane %v173, 7
        %v218 = vsel %vm197, %v217, %v172
        %v219 = vrot.slane %v174, 6
        %v220 = vsel %vm200, %v219, %v218
        %v221 = vrot.slane %v175, 5
        %v222 = vsel %vm203, %v221, %v220
        %v223 = vrot.slane %v176, 4
        %v224 = vsel %vm206, %v223, %v222
        %v225 = vrot.slane %v177, 3
        %v226 = vsel %vm209, %v225, %v224
        %v227 = vrot.slane %v178, 2
        %v228 = vsel %vm212, %v227, %v226
        %v229 = vrot.slane %v179, 1
        %v230 = vsel %vm215, %v229, %v228
        %vm233 = vcmask 130048
        %234 = vst.msk [vmem:[%s162] sm:$0xff] %vm233, %v216
        %235 = vst.msk [vmem:[%s162 + $0x8] sm:$0xff] %vm233, %v230
        %s236 = sand.u32 %s54, 1
        %s237 = scalar_lea.sflag [#allocation4], %s236
        %s238 = sand.u32 %s54, 1
        %s239 = smul.addr %s238, 16
        %s240 = scalar_lea.vmem [#allocation5], %s239
        // Predicated region
        $region29: #{tpu_custom_call.1} parent=23 // pred_check
          %p241 = pneg %p64
        $region30: #{tpu_custom_call.1} parent=23 // pred_check_branch
          %243 = sbr.rel (%p241) target = $region32
        $region31: #{tpu_custom_call.1} parent=23 // pred_region
          %s245 = ssub.s32 256, 256
          %246 = vsyncadd %s237, %s245
          %s247 = smul.addr %s18, 128
          %s248 = scalar_lea.hbm %s1, %s247
          %s249 = sshll.u32 %s240, 4
          %s250 = int_to_ptr.vmem [resolvable:$true] %s249
          %255 = dma.vmem_to_hbm [thread:$0]  %s250, 256, %s248, %s237, 128, 256, 8
        $region32: #{tpu_custom_call.1} parent=23 // pred_fallthru
          _
      $region24: #{tpu_custom_call.1} parent=5 // pred_fallthru
        _
      %p256 = scmp.le.s32.totalorder 2, %s13
      // Predicated region
      $region33: #{tpu_custom_call.1} parent=5 // pred_check
        %p257 = pneg %p256
      $region34: #{tpu_custom_call.1} parent=5 // pred_check_branch
        %259 = sbr.rel (%p257) target = $region36
      $region35: #{tpu_custom_call.1} parent=5 // pred_region
        %s260 = ssub.s32 %s13, 2
        // Predicated region
        $region37: #{tpu_custom_call.1} parent=35 // pred_check
          %p261 = pneg %p70
        $region38: #{tpu_custom_call.1} parent=35 // pred_check_branch
          %263 = sbr.rel (%p261) target = $region40
        $region39: #{tpu_custom_call.1} parent=35 // pred_region
          %s264 = sand.u32 %s55, 1
          %s265 = scalar_lea.sflag [#allocation4], %s264
          %s266 = sand.u32 %s55, 1
          %s267 = smul.addr %s266, 16
          %s268 = scalar_lea.vmem [#allocation5], %s267
          %269 = dma.done %s265, 256
        $region40: #{tpu_custom_call.1} parent=35 // pred_fallthru
          _
      $region36: #{tpu_custom_call.1} parent=5 // pred_fallthru
        _
    $region6: #{tpu_custom_call.1} parent=1 // loop_footer
      %s17 = sadd.s32 1, %s13
    $region7: #{tpu_custom_call.1} parent=1 // loop_footer_branch
      %12 = sbr.rel target = $region3
    $region8: #{tpu_custom_call.1} parent=1 // loop_exit
      _
    %270 = vsyncpa [#allocation3], 1
    %s271 = scalar_lea.sflag [#allocation3], 1
    %272 = vsyncpa %s271, 1
    %273 = vsyncpa [#allocation4], 1
    %s274 = scalar_lea.sflag [#allocation4], 1
    %275 = vsyncpa %s274, 1

</llo_original>
